<compile_context>
chip_gen: v5e
topology: v5e:2x2
jax: 0.10.0
libtpu: 0.0.40
codegen_flags: <defaults>
</compile_context>

<pallas_src>
import jax
import jax.numpy as jnp
from jax import lax
from jax.experimental import pallas as pl
from jax.experimental.pallas import tpu as pltpu


def _round_up(x, m):
    return ((x + m - 1) // m) * m


def binary_classifier_kernel(x_ref, w_in_ref, b_in_ref,
                             w_h_ref, b_h_ref,
                             w_out_ref, b_out_ref,
                             o_ref):
    TB = x_ref.shape[-1]            # batch columns in this tile (lane axis)

    # fc_in + ReLU: (H_pad, F) @ (F, TB) -> (H_pad, TB); bf16 operands on the
    # MXU, f32 accumulation, f32 elementwise.
    h = jnp.dot(w_in_ref[...], x_ref[...], preferred_element_type=jnp.float32)
    h = jnp.maximum(h + b_in_ref[...], 0.0)
    # (dropout -> identity in eval mode)

    # Hoist the shared fc_hidden weight load and the bias broadcast out of the
    # unrolled loop (JAX does not CSE repeated ref loads / broadcast_in_dim).
    w_h = w_h_ref[...]
    b_h_full = jnp.broadcast_to(b_h_ref[...], (w_h.shape[0], TB))

    # 5x (fc_hidden + ReLU), same weights every iteration, as in the PyTorch
    # module's `for i in range(5): x = relu(self.fc_hidden(x))`.
    def body(_, h):
        z = jnp.dot(w_h, h.astype(jnp.bfloat16),
                    preferred_element_type=jnp.float32)
        return jnp.maximum(z + b_h_full, 0.0)

    h = lax.fori_loop(0, 5, body, h, unroll=True)

    # fc_out + sigmoid. exp and the approximate reciprocal both run on the EUP
    # slot, keeping the epilogue off the vector ALU.
    logits = jnp.dot(w_out_ref[...], h.astype(jnp.bfloat16),
                     preferred_element_type=jnp.float32)
    logits = logits + b_out_ref[...]
    sig = pl.reciprocal(1.0 + jnp.exp(-logits), approx=True)
    # Store only the real output rows -> lane-dense (O, TB) writeback.
    o_ref[...] = sig[:o_ref.shape[0], :].astype(o_ref.dtype)


def binary_classifier_forward(x, params):
    """x: (B, input_features) float32.

    params use native PyTorch nn.Linear layout:
      w_in  (hidden, in),  b_in  (hidden,)
      w_h   (hidden, hidden), b_h (hidden,)
      w_out (out, hidden), b_out (out,)
    """
    B, F = x.shape
    H, F_w = params["w_in"].shape
    assert F_w == F, f"w_in must be PyTorch (out,in)=(H,{F}); got {params['w_in'].shape}"
    assert params["w_h"].shape == (H, H), params["w_h"].shape
    O, H_w = params["w_out"].shape
    assert H_w == H, f"w_out must be PyTorch (out,in)=({O},{H}); got {params['w_out'].shape}"
    assert params["b_in"].size == H and params["b_h"].size == H
    assert params["b_out"].size == O

    # Hidden/output feature padding for 128-lane MXU tiles; input features F
    # are NOT padded in HBM (the K=F contraction is padded inside the MXU).
    H_pad = _round_up(H, 128)
    O_pad = max(_round_up(O, 8), 8)

    # Batch tile: up to 2048 lanes, multiple of 128. Keep >=2 grid steps once
    # B > 128 (v7x megacore sharding); padding waste is always < one tile.
    n_steps = max(1, pl.cdiv(B, 2048))
    if n_steps == 1 and B > 128:
        n_steps = 2
    TB = _round_up(pl.cdiv(B, n_steps), 128)
    B_pad = _round_up(B, TB)

    def pad2(a, rows, cols, dtype):
        out = jnp.zeros((rows, cols), dtype)
        return out.at[:a.shape[0], :a.shape[1]].set(a.astype(dtype))

    # Zero padding keeps the math exact: padded hidden rows get zero weights
    # and zero bias, so they stay 0 after ReLU and never contaminate later
    # matmuls. Padded batch columns compute relu(bias) garbage that is sliced
    # away in the wrapper.
    x_t   = pad2(x.T,                             F,     B_pad, jnp.bfloat16)
    w_in  = pad2(params["w_in"],                  H_pad, F,     jnp.bfloat16)
    b_in  = pad2(params["b_in"].reshape(-1, 1),   H_pad, 1,     jnp.float32)
    w_h   = pad2(params["w_h"],                   H_pad, H_pad, jnp.bfloat16)
    b_h   = pad2(params["b_h"].reshape(-1, 1),    H_pad, 1,     jnp.float32)
    w_out = pad2(params["w_out"],                 O_pad, H_pad, jnp.bfloat16)
    b_out = pad2(params["b_out"].reshape(-1, 1),  O_pad, 1,     jnp.float32)

    flops = 2 * B_pad * (F * H_pad + 5 * H_pad * H_pad + H_pad * O_pad)
    bytes_accessed = (x_t.size * 2 + w_in.size * 2 + w_h.size * 2
                      + w_out.size * 2
                      + (b_in.size + b_h.size + b_out.size) * 4
                      + O * B_pad * 4)

    out = pl.pallas_call(
        binary_classifier_kernel,
        out_shape=jax.ShapeDtypeStruct((O, B_pad), jnp.float32),
        grid=(B_pad // TB,),
        in_specs=[
            pl.BlockSpec((F, TB),        lambda i: (0, i)),  # xT: batch-tiled
            pl.BlockSpec((H_pad, F),     lambda i: (0, 0)),  # weights/biases
            pl.BlockSpec((H_pad, 1),     lambda i: (0, 0)),  # stay VMEM-
            pl.BlockSpec((H_pad, H_pad), lambda i: (0, 0)),  # resident via
            pl.BlockSpec((H_pad, 1),     lambda i: (0, 0)),  # constant
            pl.BlockSpec((O_pad, H_pad), lambda i: (0, 0)),  # index_maps
            pl.BlockSpec((O_pad, 1),     lambda i: (0, 0)),
        ],
        out_specs=pl.BlockSpec((O, TB), lambda i: (0, i)),   # lane-dense out
        compiler_params=pltpu.CompilerParams(
            dimension_semantics=("parallel",),    # megacore sharding on v7x
            vmem_limit_bytes=32 * 1024 * 1024,    # plenty for TB<=2048, <64MiB
        ),
        cost_estimate=pl.CostEstimate(
            flops=flops,
            transcendentals=B_pad * O_pad,
            bytes_accessed=bytes_accessed,
        ),
    )(x_t, w_in, b_in, w_h, b_h, w_out, b_out)

    # (O, B_pad) -> (B, O)
    return out[:, :B].T


def init_params(key, input_features, hidden_dim, output_dim):
    """Deterministic init mimicking nn.Linear's U(-1/sqrt(fan_in), 1/sqrt(fan_in)).

    Stored in native PyTorch layout: weights (out, in), biases (out,)."""
    ks = jax.random.split(key, 6)

    def uniform(k, shape, fan_in):
        bound = 1.0 / jnp.sqrt(jnp.float32(fan_in))
        return jax.random.uniform(k, shape, jnp.float32, -bound, bound)

    return {
        "w_in":  uniform(ks[0], (hidden_dim, input_features), input_features),
        "b_in":  uniform(ks[1], (hidden_dim,), input_features),
        "w_h":   uniform(ks[2], (hidden_dim, hidden_dim), hidden_dim),
        "b_h":   uniform(ks[3], (hidden_dim,), hidden_dim),
        "w_out": uniform(ks[4], (output_dim, hidden_dim), hidden_dim),
        "b_out": uniform(ks[5], (output_dim,), hidden_dim),
    }


if __name__ == "__main__":
    key = jax.random.PRNGKey(0)
    batch = 2
    input_features = 16
    hidden_dim = 32
    output_dim = 1

    k_x, k_p = jax.random.split(key)
    x = jax.random.normal(k_x, (batch, input_features), jnp.float32)
    params = init_params(k_p, input_features, hidden_dim, output_dim)

    out = binary_classifier_forward(x, params)
    out = jax.block_until_ready(out)

    # Reference in plain JAX, mirroring the kernel's bf16 operands / f32
    # accumulation (eval-mode dropout == identity). Weights in PyTorch layout.
    bf = lambda a: a.astype(jnp.bfloat16).astype(jnp.float32)
    h = jnp.maximum(bf(x) @ bf(params["w_in"]).T + params["b_in"], 0.0)
    for _ in range(5):
        h = jnp.maximum(bf(h) @ bf(params["w_h"]).T + params["b_h"], 0.0)
    ref = jax.nn.sigmoid(bf(h) @ bf(params["w_out"]).T + params["b_out"])

    assert out.shape == (batch, output_dim), out.shape
    assert jnp.allclose(out, ref, atol=5e-3, rtol=5e-3), (out, ref)

    print("KERNEL_OK")
</pallas_src>

<mosaic_0001>
module attributes {stable_mosaic.version = 11 : i64} {
  func.func @binary_classifier_kernel(%arg0: i32, %arg1: memref<16x128xbf16, #tpu.memory_space<vmem>>, %arg2: memref<128x16xbf16, #tpu.memory_space<vmem>>, %arg3: memref<128x1xf32, #tpu.memory_space<vmem>>, %arg4: memref<128x128xbf16, #tpu.memory_space<vmem>>, %arg5: memref<128x1xf32, #tpu.memory_space<vmem>>, %arg6: memref<8x128xbf16, #tpu.memory_space<vmem>>, %arg7: memref<8x1xf32, #tpu.memory_space<vmem>>, %arg8: memref<1x128xf32, #tpu.memory_space<vmem>>) attributes {dimension_semantics = [#tpu.dimension_semantics<parallel>], iteration_bounds = array<i64: 1>, scalar_prefetch = 0 : i64, scratch_operands = 0 : i64, tpu.core_type = #tpu.core_type<tc>, window_params = [{transform_indices = @transform_0, window_bounds = array<i64: 16, 128>}, {pipeline_mode = #tpu.pipeline_mode<synchronous>, transform_indices = @transform_1, window_bounds = array<i64: 128, 16>}, {pipeline_mode = #tpu.pipeline_mode<synchronous>, transform_indices = @transform_2, window_bounds = array<i64: 128, 1>}, {pipeline_mode = #tpu.pipeline_mode<synchronous>, transform_indices = @transform_3, window_bounds = array<i64: 128, 128>}, {pipeline_mode = #tpu.pipeline_mode<synchronous>, transform_indices = @transform_4, window_bounds = array<i64: 128, 1>}, {pipeline_mode = #tpu.pipeline_mode<synchronous>, transform_indices = @transform_5, window_bounds = array<i64: 8, 128>}, {pipeline_mode = #tpu.pipeline_mode<synchronous>, transform_indices = @transform_6, window_bounds = array<i64: 8, 1>}, {transform_indices = @transform_7, window_bounds = array<i64: 1, 128>}]} {
    %c0 = arith.constant 0 : index
    %c0_0 = arith.constant 0 : index
    %0 = vector.load %arg2[%c0, %c0_0] : memref<128x16xbf16, #tpu.memory_space<vmem>>, vector<128x16xbf16>
    %c0_1 = arith.constant 0 : index
    %c0_2 = arith.constant 0 : index
    %1 = vector.load %arg1[%c0_1, %c0_2] : memref<16x128xbf16, #tpu.memory_space<vmem>>, vector<16x128xbf16>
    %cst = arith.constant dense<0.000000e+00> : vector<128x128xf32>
    %2 = tpu.matmul %0, %1, %cst {dimension_numbers = #tpu.dot_dimension_numbers<[1], [0], [0], [1], [0, 0, 1, 1], [], []>} : vector<128x16xbf16>, vector<16x128xbf16>, vector<128x128xf32> -> vector<128x128xf32>
    %c0_3 = arith.constant 0 : index
    %c0_4 = arith.constant 0 : index
    %3 = vector.load %arg3[%c0_3, %c0_4] : memref<128x1xf32, #tpu.memory_space<vmem>>, vector<128x1xf32>
    %4 = vector.broadcast %3 : vector<128x1xf32> to vector<128x128xf32>
    %5 = arith.addf %2, %4 : vector<128x128xf32>
    %cst_5 = arith.constant 0.000000e+00 : f32
    %6 = vector.broadcast %cst_5 : f32 to vector<128x128xf32>
    %7 = arith.maximumf %5, %6 : vector<128x128xf32>
    %c0_6 = arith.constant 0 : index
    %c0_7 = arith.constant 0 : index
    %8 = vector.load %arg4[%c0_6, %c0_7] : memref<128x128xbf16, #tpu.memory_space<vmem>>, vector<128x128xbf16>
    %c0_8 = arith.constant 0 : index
    %c0_9 = arith.constant 0 : index
    %9 = vector.load %arg5[%c0_8, %c0_9] : memref<128x1xf32, #tpu.memory_space<vmem>>, vector<128x1xf32>
    %10 = vector.shape_cast %9 : vector<128x1xf32> to vector<128x1xf32>
    %11 = vector.broadcast %10 : vector<128x1xf32> to vector<128x128xf32>
    %c0_i32 = arith.constant 0 : i32
    %12 = arith.truncf %7 : vector<128x128xf32> to vector<128x128xbf16>
    %cst_10 = arith.constant dense<0.000000e+00> : vector<128x128xf32>
    %13 = tpu.matmul %8, %12, %cst_10 {dimension_numbers = #tpu.dot_dimension_numbers<[1], [0], [0], [1], [0, 0, 1, 1], [], []>} : vector<128x128xbf16>, vector<128x128xbf16>, vector<128x128xf32> -> vector<128x128xf32>
    %14 = arith.addf %13, %11 : vector<128x128xf32>
    %cst_11 = arith.constant 0.000000e+00 : f32
    %15 = vector.broadcast %cst_11 : f32 to vector<128x128xf32>
    %16 = arith.maximumf %14, %15 : vector<128x128xf32>
    %c1_i32 = arith.constant 1 : i32
    %17 = arith.truncf %16 : vector<128x128xf32> to vector<128x128xbf16>
    %cst_12 = arith.constant dense<0.000000e+00> : vector<128x128xf32>
    %18 = tpu.matmul %8, %17, %cst_12 {dimension_numbers = #tpu.dot_dimension_numbers<[1], [0], [0], [1], [0, 0, 1, 1], [], []>} : vector<128x128xbf16>, vector<128x128xbf16>, vector<128x128xf32> -> vector<128x128xf32>
    %19 = arith.addf %18, %11 : vector<128x128xf32>
    %cst_13 = arith.constant 0.000000e+00 : f32
    %20 = vector.broadcast %cst_13 : f32 to vector<128x128xf32>
    %21 = arith.maximumf %19, %20 : vector<128x128xf32>
    %c2_i32 = arith.constant 2 : i32
    %22 = arith.truncf %21 : vector<128x128xf32> to vector<128x128xbf16>
    %cst_14 = arith.constant dense<0.000000e+00> : vector<128x128xf32>
    %23 = tpu.matmul %8, %22, %cst_14 {dimension_numbers = #tpu.dot_dimension_numbers<[1], [0], [0], [1], [0, 0, 1, 1], [], []>} : vector<128x128xbf16>, vector<128x128xbf16>, vector<128x128xf32> -> vector<128x128xf32>
    %24 = arith.addf %23, %11 : vector<128x128xf32>
    %cst_15 = arith.constant 0.000000e+00 : f32
    %25 = vector.broadcast %cst_15 : f32 to vector<128x128xf32>
    %26 = arith.maximumf %24, %25 : vector<128x128xf32>
    %c3_i32 = arith.constant 3 : i32
    %27 = arith.truncf %26 : vector<128x128xf32> to vector<128x128xbf16>
    %cst_16 = arith.constant dense<0.000000e+00> : vector<128x128xf32>
    %28 = tpu.matmul %8, %27, %cst_16 {dimension_numbers = #tpu.dot_dimension_numbers<[1], [0], [0], [1], [0, 0, 1, 1], [], []>} : vector<128x128xbf16>, vector<128x128xbf16>, vector<128x128xf32> -> vector<128x128xf32>
    %29 = arith.addf %28, %11 : vector<128x128xf32>
    %cst_17 = arith.constant 0.000000e+00 : f32
    %30 = vector.broadcast %cst_17 : f32 to vector<128x128xf32>
    %31 = arith.maximumf %29, %30 : vector<128x128xf32>
    %c4_i32 = arith.constant 4 : i32
    %32 = arith.truncf %31 : vector<128x128xf32> to vector<128x128xbf16>
    %cst_18 = arith.constant dense<0.000000e+00> : vector<128x128xf32>
    %33 = tpu.matmul %8, %32, %cst_18 {dimension_numbers = #tpu.dot_dimension_numbers<[1], [0], [0], [1], [0, 0, 1, 1], [], []>} : vector<128x128xbf16>, vector<128x128xbf16>, vector<128x128xf32> -> vector<128x128xf32>
    %34 = arith.addf %33, %11 : vector<128x128xf32>
    %cst_19 = arith.constant 0.000000e+00 : f32
    %35 = vector.broadcast %cst_19 : f32 to vector<128x128xf32>
    %36 = arith.maximumf %34, %35 : vector<128x128xf32>
    %c0_20 = arith.constant 0 : index
    %c0_21 = arith.constant 0 : index
    %37 = vector.load %arg6[%c0_20, %c0_21] : memref<8x128xbf16, #tpu.memory_space<vmem>>, vector<8x128xbf16>
    %38 = arith.truncf %36 : vector<128x128xf32> to vector<128x128xbf16>
    %cst_22 = arith.constant dense<0.000000e+00> : vector<8x128xf32>
    %39 = tpu.matmul %37, %38, %cst_22 {dimension_numbers = #tpu.dot_dimension_numbers<[1], [0], [0], [1], [0, 0, 1, 1], [], []>} : vector<8x128xbf16>, vector<128x128xbf16>, vector<8x128xf32> -> vector<8x128xf32>
    %c0_23 = arith.constant 0 : index
    %c0_24 = arith.constant 0 : index
    %40 = vector.load %arg7[%c0_23, %c0_24] : memref<8x1xf32, #tpu.memory_space<vmem>>, vector<8x1xf32>
    %41 = vector.broadcast %40 : vector<8x1xf32> to vector<8x128xf32>
    %42 = arith.addf %39, %41 : vector<8x128xf32>
    %cst_25 = arith.constant 0.000000e+00 : f32
    %43 = vector.broadcast %cst_25 : f32 to vector<8x128xf32>
    %44 = arith.subf %43, %42 : vector<8x128xf32>
    %45 = math.exp %44 : vector<8x128xf32>
    %cst_26 = arith.constant 1.000000e+00 : f32
    %46 = vector.broadcast %cst_26 : f32 to vector<8x128xf32>
    %47 = arith.addf %46, %45 : vector<8x128xf32>
    %48 = tpu.reciprocal %47 {approx = true} : vector<8x128xf32> -> vector<8x128xf32>
    %49 = vector.extract_strided_slice %48 {offsets = [0, 0], sizes = [1, 128], strides = [1, 1]} : vector<8x128xf32> to vector<1x128xf32>
    %c0_27 = arith.constant 0 : index
    %c0_28 = arith.constant 0 : index
    %50 = vector.load %arg8[%c0_27, %c0_28] : memref<1x128xf32, #tpu.memory_space<vmem>>, vector<1x128xf32>
    tpu.vector_store %arg8[%c0_27, %c0_28], %49 {strides = array<i32>} : memref<1x128xf32, #tpu.memory_space<vmem>>, vector<1x128xf32>,
    return
  }
  func.func @transform_0(%arg0: i32) -> (i32, i32) {
    %c0_i32 = arith.constant 0 : i32
    %c0_i32_0 = arith.constant 0 : i32
    return %c0_i32, %arg0 : i32, i32
  }
  func.func @transform_1(%arg0: i32) -> (i32, i32) {
    %c0_i32 = arith.constant 0 : i32
    %c0_i32_0 = arith.constant 0 : i32
    %c0_i32_1 = arith.constant 0 : i32
    return %c0_i32, %c0_i32_0 : i32, i32
  }
  func.func @transform_2(%arg0: i32) -> (i32, i32) {
    %c0_i32 = arith.constant 0 : i32
    %c0_i32_0 = arith.constant 0 : i32
    %c0_i32_1 = arith.constant 0 : i32
    return %c0_i32, %c0_i32_0 : i32, i32
  }
  func.func @transform_3(%arg0: i32) -> (i32, i32) {
    %c0_i32 = arith.constant 0 : i32
    %c0_i32_0 = arith.constant 0 : i32
    %c0_i32_1 = arith.constant 0 : i32
    return %c0_i32, %c0_i32_0 : i32, i32
  }
  func.func @transform_4(%arg0: i32) -> (i32, i32) {
    %c0_i32 = arith.constant 0 : i32
    %c0_i32_0 = arith.constant 0 : i32
    %c0_i32_1 = arith.constant 0 : i32
    return %c0_i32, %c0_i32_0 : i32, i32
  }
  func.func @transform_5(%arg0: i32) -> (i32, i32) {
    %c0_i32 = arith.constant 0 : i32
    %c0_i32_0 = arith.constant 0 : i32
    %c0_i32_1 = arith.constant 0 : i32
    return %c0_i32, %c0_i32_0 : i32, i32
  }
  func.func @transform_6(%arg0: i32) -> (i32, i32) {
    %c0_i32 = arith.constant 0 : i32
    %c0_i32_0 = arith.constant 0 : i32
    %c0_i32_1 = arith.constant 0 : i32
    return %c0_i32, %c0_i32_0 : i32, i32
  }
  func.func @transform_7(%arg0: i32) -> (i32, i32) {
    %c0_i32 = arith.constant 0 : i32
    %c0_i32_0 = arith.constant 0 : i32
    return %c0_i32, %arg0 : i32, i32
  }
}

</mosaic_0001>

<llo_original>
// kernel: tpu_custom_call.1
$region0: #{tpu_custom_call.1}
  #allocation0 [shape = 'u32[]', space=smem, size = 0x4, offset = 0x4, fixed_abs, tag = 'smem constant byte address 0x4 - core index']
  #allocation1 [shape = 'u32[72,128]{1,0:T(1,128)}', space=vmem, size = 0x9000, scoped, tag = 'internal scratch']
  %s0 = inlined_call_operand.vmem [shape: bf16[16,128], index: 0, kind: input, shape index: {}]
  %s1 = inlined_call_operand.vmem [shape: bf16[128,16], index: 1, kind: input, shape index: {}]
  %s2 = inlined_call_operand.vmem [shape: f32[128,1], index: 2, kind: input, shape index: {}]
  %s3 = inlined_call_operand.vmem [shape: bf16[128,128], index: 3, kind: input, shape index: {}]
  %s4 = inlined_call_operand.vmem [shape: f32[128,1], index: 4, kind: input, shape index: {}]
  %s5 = inlined_call_operand.vmem [shape: bf16[8,128], index: 5, kind: input, shape index: {}]
  %s6 = inlined_call_operand.vmem [shape: f32[8,1], index: 6, kind: input, shape index: {}]
  %s7 = inlined_call_operand.hbm [shape: f32[1,128], index: 7, kind: output, shape index: {}]
  %s8 = sld [smem:[#allocation0]]
  $region38: #{tpu_custom_call.1} parent=0
    _
  %s10 = ssub.s32 1, %s8
  %s11 = scalar_select 0, %s10, %s8
  $region1: #{tpu_custom_call.1} parent=0
    #allocation2 [shape = 'u8[512]{0}', space=vmem, size = 0x400, scoped, tag = 'output window, operand 0, single buffered']
    #allocation3 [shape = 's32[1]{0}', space=sflag, size = 0x4, scoped, tag = 'scoped memory for tpu_custom_call.1']
    %12 = vsyncpa [#allocation3], 0
    // Predicated region
    $region2: #{tpu_custom_call.1} parent=1 // pred_check
      _
    $region3: #{tpu_custom_call.1} parent=1 // pred_check_branch
      %14 = sbr.rel (0) target = $region5
    $region4: #{tpu_custom_call.1} parent=1 // pred_region
      _
    $region5: #{tpu_custom_call.1} parent=1 // pred_fallthru
      _
    // Predicated region
    $region6: #{tpu_custom_call.1} parent=1 // pred_check
      _
    $region7: #{tpu_custom_call.1} parent=1 // pred_check_branch
      %16 = sbr.rel (0) target = $region9
    $region8: #{tpu_custom_call.1} parent=1 // pred_region
      _
    $region9: #{tpu_custom_call.1} parent=1 // pred_fallthru
      _
    // Predicated region
    $region10: #{tpu_custom_call.1} parent=1 // pred_check
      _
    $region11: #{tpu_custom_call.1} parent=1 // pred_check_branch
      %18 = sbr.rel (0) target = $region13
    $region12: #{tpu_custom_call.1} parent=1 // pred_region
      _
    $region13: #{tpu_custom_call.1} parent=1 // pred_fallthru
      _
    // Predicated region
    $region14: #{tpu_custom_call.1} parent=1 // pred_check
      _
    $region15: #{tpu_custom_call.1} parent=1 // pred_check_branch
      %20 = sbr.rel (0) target = $region17
    $region16: #{tpu_custom_call.1} parent=1 // pred_region
      _
    $region17: #{tpu_custom_call.1} parent=1 // pred_fallthru
      _
    // Predicated region
    $region18: #{tpu_custom_call.1} parent=1 // pred_check
      _
    $region19: #{tpu_custom_call.1} parent=1 // pred_check_branch
      %22 = sbr.rel (0) target = $region21
    $region20: #{tpu_custom_call.1} parent=1 // pred_region
      _
    $region21: #{tpu_custom_call.1} parent=1 // pred_fallthru
      _
    // Predicated region
    $region22: #{tpu_custom_call.1} parent=1 // pred_check
      _
    $region23: #{tpu_custom_call.1} parent=1 // pred_check_branch
      %24 = sbr.rel (0) target = $region25
    $region24: #{tpu_custom_call.1} parent=1 // pred_region
      _
    $region25: #{tpu_custom_call.1} parent=1 // pred_fallthru
      _
    // Predicated region
    $region26: #{tpu_custom_call.1} parent=1 // pred_check
      _
    $region27: #{tpu_custom_call.1} parent=1 // pred_check_branch
      %26 = sbr.rel (0) target = $region29
    $region28: #{tpu_custom_call.1} parent=1 // pred_region
      _
    $region29: #{tpu_custom_call.1} parent=1 // pred_fallthru
      _
    %v28 = vld [vmem:[%s1] sm:$0xf]
    %v29 = vld [vmem:[%s1 + $0x4] sm:$0xf]
    %v30 = vld [vmem:[%s1 + $0x8] sm:$0xf]
    %v31 = vld [vmem:[%s1 + $0xc] sm:$0xf]
    %v32 = vld [vmem:[%s1 + $0x10] sm:$0xf]
    %v33 = vld [vmem:[%s1 + $0x14] sm:$0xf]
    %v34 = vld [vmem:[%s1 + $0x18] sm:$0xf]
    %v35 = vld [vmem:[%s1 + $0x1c] sm:$0xf]
    %v36 = vld [vmem:[%s1 + $0x20] sm:$0xf]
    %v37 = vld [vmem:[%s1 + $0x24] sm:$0xf]
    %v38 = vld [vmem:[%s1 + $0x28] sm:$0xf]
    %v39 = vld [vmem:[%s1 + $0x2c] sm:$0xf]
    %v40 = vld [vmem:[%s1 + $0x30] sm:$0xf]
    %v41 = vld [vmem:[%s1 + $0x34] sm:$0xf]
    %v42 = vld [vmem:[%s1 + $0x38] sm:$0xf]
    %v43 = vld [vmem:[%s1 + $0x3c] sm:$0xf]
    %v44 = vld [vmem:[%s0] sm:$0xf]
    %v45 = vld [vmem:[%s0 + $0x4] sm:$0xf]
    %v46 = vld [vmem:[%s2] sm:$0xff]
    %v47 = vld [vmem:[%s2 + $0x8] sm:$0xff]
    %v48 = vld [vmem:[%s2 + $0x10] sm:$0xff]
    %v49 = vld [vmem:[%s2 + $0x18] sm:$0xff]
    %v50 = vld [vmem:[%s2 + $0x20] sm:$0xff]
    %v51 = vld [vmem:[%s2 + $0x28] sm:$0xff]
    %v52 = vld [vmem:[%s2 + $0x30] sm:$0xff]
    %v53 = vld [vmem:[%s2 + $0x38] sm:$0xff]
    %v54 = vld [vmem:[%s2 + $0x40] sm:$0xff]
    %v55 = vld [vmem:[%s2 + $0x48] sm:$0xff]
    %v56 = vld [vmem:[%s2 + $0x50] sm:$0xff]
    %v57 = vld [vmem:[%s2 + $0x58] sm:$0xff]
    %v58 = vld [vmem:[%s2 + $0x60] sm:$0xff]
    %v59 = vld [vmem:[%s2 + $0x68] sm:$0xff]
    %v60 = vld [vmem:[%s2 + $0x70] sm:$0xff]
    %v61 = vld [vmem:[%s2 + $0x78] sm:$0xff]
    %63 = vset.pattern.permute.xlu0 0
    %64 = vperm.xlu0 %63, %v46
    %v65 = vpop.permute.xlu0 %64
    %68 = vset.pattern.permute.xlu0 0
    %69 = vperm.xlu0 %68, %v47
    %v70 = vpop.permute.xlu0 %69
    %73 = vset.pattern.permute.xlu0 0
    %74 = vperm.xlu0 %73, %v48
    %v75 = vpop.permute.xlu0 %74
    %78 = vset.pattern.permute.xlu0 0
    %79 = vperm.xlu0 %78, %v49
    %v80 = vpop.permute.xlu0 %79
    %83 = vset.pattern.permute.xlu0 0
    %84 = vperm.xlu0 %83, %v50
    %v85 = vpop.permute.xlu0 %84
    %88 = vset.pattern.permute.xlu0 0
    %89 = vperm.xlu0 %88, %v51
    %v90 = vpop.permute.xlu0 %89
    %93 = vset.pattern.permute.xlu0 0
    %94 = vperm.xlu0 %93, %v52
    %v95 = vpop.permute.xlu0 %94
    %98 = vset.pattern.permute.xlu0 0
    %99 = vperm.xlu0 %98, %v53
    %v100 = vpop.permute.xlu0 %99
    %103 = vset.pattern.permute.xlu0 0
    %104 = vperm.xlu0 %103, %v54
    %v105 = vpop.permute.xlu0 %104
    %108 = vset.pattern.permute.xlu0 0
    %109 = vperm.xlu0 %108, %v55
    %v110 = vpop.permute.xlu0 %109
    %113 = vset.pattern.permute.xlu0 0
    %114 = vperm.xlu0 %113, %v56
    %v115 = vpop.permute.xlu0 %114
    %118 = vset.pattern.permute.xlu0 0
    %119 = vperm.xlu0 %118, %v57
    %v120 = vpop.permute.xlu0 %119
    %123 = vset.pattern.permute.xlu0 0
    %124 = vperm.xlu0 %123, %v58
    %v125 = vpop.permute.xlu0 %124
    %128 = vset.pattern.permute.xlu0 0
    %129 = vperm.xlu0 %128, %v59
    %v130 = vpop.permute.xlu0 %129
    %133 = vset.pattern.permute.xlu0 0
    %134 = vperm.xlu0 %133, %v60
    %v135 = vpop.permute.xlu0 %134
    %138 = vset.pattern.permute.xlu0 0
    %139 = vperm.xlu0 %138, %v61
    %v140 = vpop.permute.xlu0 %139
    %v158 = vunpack.c.l.b16 %v28
    %v159 = vunpack.c.l.b16 %v29
    %v160 = vunpack.c.l.b16 %v30
    %v161 = vunpack.c.l.b16 %v31
    %v162 = vunpack.c.l.b16 %v32
    %v163 = vunpack.c.l.b16 %v33
    %v164 = vunpack.c.l.b16 %v34
    %v165 = vunpack.c.l.b16 %v35
    %v166 = vunpack.c.l.b16 %v36
    %v167 = vunpack.c.l.b16 %v37
    %v168 = vunpack.c.l.b16 %v38
    %v169 = vunpack.c.l.b16 %v39
    %v170 = vunpack.c.l.b16 %v40
    %v171 = vunpack.c.l.b16 %v41
    %v172 = vunpack.c.l.b16 %v42
    %v173 = vunpack.c.l.b16 %v43
    %v174 = vpack.c.b16 %v159, %v158
    %v175 = vpack.c.b16 %v161, %v160
    %v176 = vpack.c.b16 %v163, %v162
    %v177 = vpack.c.b16 %v165, %v164
    %v178 = vpack.c.b16 %v167, %v166
    %v179 = vpack.c.b16 %v169, %v168
    %v180 = vpack.c.b16 %v171, %v170
    %v181 = vpack.c.b16 %v173, %v172
    %v184 = vunpack.c.l.b16 %v44
    %v185 = vunpack.c.l.b16 %v45
    %v186 = vpack.c.b16 %v185, %v184
    %vm188 = vcmask 130048
    %v190 = vsel %vm188, %v174, 0
    %v193 = vsel %vm188, %v175, 0
    %v196 = vsel %vm188, %v176, 0
    %v199 = vsel %vm188, %v177, 0
    %v202 = vsel %vm188, %v178, 0
    %v205 = vsel %vm188, %v179, 0
    %v208 = vsel %vm188, %v180, 0
    %v211 = vsel %vm188, %v181, 0
    %213 = vmatpush.bf16.msra.mxu0 0
    %214 = vmatpush.bf16.msra.mxu0 0
    %215 = vmatpush.bf16.msra.mxu0 0
    %216 = vmatpush.bf16.msra.mxu0 0
    %217 = vmatpush.bf16.msra.mxu0 0
    %218 = vmatpush.bf16.msra.mxu0 0
    %219 = vmatpush.bf16.msra.mxu0 0
    %220 = vmatpush.bf16.msra.mxu0 %v186
    %221 = vmatmul.bf16.gmra.mxu0 %v190
    %v222 = vpop.f32.mrf.mxu0
    %v223 = vadd.f32 %v65, %v222
    %v224 = vpop.f32.mrf.mxu0
    %v225 = vadd.f32 %v70, %v224
    %226 = vmatmul.bf16.gmra.mxu0 %v193
    %v227 = vpop.f32.mrf.mxu0
    %v228 = vadd.f32 %v75, %v227
    %v229 = vpop.f32.mrf.mxu0
    %v230 = vadd.f32 %v80, %v229
    %231 = vmatmul.bf16.gmra.mxu0 %v196
    %v232 = vpop.f32.mrf.mxu0
    %v233 = vadd.f32 %v85, %v232
    %v234 = vpop.f32.mrf.mxu0
    %v235 = vadd.f32 %v90, %v234
    %236 = vmatmul.bf16.gmra.mxu0 %v199
    %v237 = vpop.f32.mrf.mxu0
    %v238 = vadd.f32 %v95, %v237
    %v239 = vpop.f32.mrf.mxu0
    %v240 = vadd.f32 %v100, %v239
    %241 = vmatmul.bf16.gmra.mxu0 %v202
    %v242 = vpop.f32.mrf.mxu0
    %v243 = vadd.f32 %v105, %v242
    %v244 = vpop.f32.mrf.mxu0
    %v245 = vadd.f32 %v110, %v244
    %246 = vmatmul.bf16.gmra.mxu0 %v205
    %v247 = vpop.f32.mrf.mxu0
    %v248 = vadd.f32 %v115, %v247
    %v249 = vpop.f32.mrf.mxu0
    %v250 = vadd.f32 %v120, %v249
    %251 = vmatmul.bf16.gmra.mxu0 %v208
    %v252 = vpop.f32.mrf.mxu0
    %v253 = vadd.f32 %v125, %v252
    %v254 = vpop.f32.mrf.mxu0
    %v255 = vadd.f32 %v130, %v254
    %256 = vmatmul.bf16.gmra.mxu0 %v211
    %v257 = vpop.f32.mrf.mxu0
    %v258 = vadd.f32 %v135, %v257
    %v259 = vpop.f32.mrf.mxu0
    %v260 = vadd.f32 %v140, %v259
    %261 = vdwg.mxu0
    %v262 = vmax.f32 %v223, 0.0
    %v263 = vmax.f32 %v225, 0.0
    %v264 = vmax.f32 %v228, 0.0
    %v265 = vmax.f32 %v230, 0.0
    %v266 = vmax.f32 %v233, 0.0
    %v267 = vmax.f32 %v235, 0.0
    %v268 = vmax.f32 %v238, 0.0
    %v269 = vmax.f32 %v240, 0.0
    %v270 = vmax.f32 %v243, 0.0
    %v271 = vmax.f32 %v245, 0.0
    %v272 = vmax.f32 %v248, 0.0
    %v273 = vmax.f32 %v250, 0.0
    %v274 = vmax.f32 %v253, 0.0
    %v275 = vmax.f32 %v255, 0.0
    %v276 = vmax.f32 %v258, 0.0
    %v277 = vmax.f32 %v260, 0.0
    %v278 = vld [vmem:[%s3] sm:$0xf]
    %v279 = vld [vmem:[%s3 + $0x4] sm:$0xf]
    %v280 = vld [vmem:[%s3 + $0x8] sm:$0xf]
    %v281 = vld [vmem:[%s3 + $0xc] sm:$0xf]
    %v282 = vld [vmem:[%s3 + $0x10] sm:$0xf]
    %v283 = vld [vmem:[%s3 + $0x14] sm:$0xf]
    %v284 = vld [vmem:[%s3 + $0x18] sm:$0xf]
    %v285 = vld [vmem:[%s3 + $0x1c] sm:$0xf]
    %v286 = vld [vmem:[%s3 + $0x20] sm:$0xf]
    %v287 = vld [vmem:[%s3 + $0x24] sm:$0xf]
    %v288 = vld [vmem:[%s3 + $0x28] sm:$0xf]
    %v289 = vld [vmem:[%s3 + $0x2c] sm:$0xf]
    %v290 = vld [vmem:[%s3 + $0x30] sm:$0xf]
    %v291 = vld [vmem:[%s3 + $0x34] sm:$0xf]
    %v292 = vld [vmem:[%s3 + $0x38] sm:$0xf]
    %v293 = vld [vmem:[%s3 + $0x3c] sm:$0xf]
    %v294 = vld [vmem:[%s4] sm:$0xff]
    %v295 = vld [vmem:[%s4 + $0x8] sm:$0xff]
    %v296 = vld [vmem:[%s4 + $0x10] sm:$0xff]
    %v297 = vld [vmem:[%s4 + $0x18] sm:$0xff]
    %v298 = vld [vmem:[%s4 + $0x20] sm:$0xff]
    %v299 = vld [vmem:[%s4 + $0x28] sm:$0xff]
    %v300 = vld [vmem:[%s4 + $0x30] sm:$0xff]
    %v301 = vld [vmem:[%s4 + $0x38] sm:$0xff]
    %v302 = vld [vmem:[%s4 + $0x40] sm:$0xff]
    %v303 = vld [vmem:[%s4 + $0x48] sm:$0xff]
    %v304 = vld [vmem:[%s4 + $0x50] sm:$0xff]
    %v305 = vld [vmem:[%s4 + $0x58] sm:$0xff]
    %v306 = vld [vmem:[%s4 + $0x60] sm:$0xff]
    %v307 = vld [vmem:[%s4 + $0x68] sm:$0xff]
    %v308 = vld [vmem:[%s4 + $0x70] sm:$0xff]
    %v309 = vld [vmem:[%s4 + $0x78] sm:$0xff]
    %311 = vset.pattern.permute.xlu0 0
    %312 = vperm.xlu0 %311, %v294
    %v313 = vpop.permute.xlu0 %312
    %316 = vset.pattern.permute.xlu0 0
    %317 = vperm.xlu0 %316, %v295
    %v318 = vpop.permute.xlu0 %317
    %321 = vset.pattern.permute.xlu0 0
    %322 = vperm.xlu0 %321, %v296
    %v323 = vpop.permute.xlu0 %322
    %326 = vset.pattern.permute.xlu0 0
    %327 = vperm.xlu0 %326, %v297
    %v328 = vpop.permute.xlu0 %327
    %331 = vset.pattern.permute.xlu0 0
    %332 = vperm.xlu0 %331, %v298
    %v333 = vpop.permute.xlu0 %332
    %336 = vset.pattern.permute.xlu0 0
    %337 = vperm.xlu0 %336, %v299
    %v338 = vpop.permute.xlu0 %337
    %341 = vset.pattern.permute.xlu0 0
    %342 = vperm.xlu0 %341, %v300
    %v343 = vpop.permute.xlu0 %342
    %346 = vset.pattern.permute.xlu0 0
    %347 = vperm.xlu0 %346, %v301
    %v348 = vpop.permute.xlu0 %347
    %351 = vset.pattern.permute.xlu0 0
    %352 = vperm.xlu0 %351, %v302
    %v353 = vpop.permute.xlu0 %352
    %356 = vset.pattern.permute.xlu0 0
    %357 = vperm.xlu0 %356, %v303
    %v358 = vpop.permute.xlu0 %357
    %361 = vset.pattern.permute.xlu0 0
    %362 = vperm.xlu0 %361, %v304
    %v363 = vpop.permute.xlu0 %362
    %366 = vset.pattern.permute.xlu0 0
    %367 = vperm.xlu0 %366, %v305
    %v368 = vpop.permute.xlu0 %367
    %371 = vset.pattern.permute.xlu0 0
    %372 = vperm.xlu0 %371, %v306
    %v373 = vpop.permute.xlu0 %372
    %376 = vset.pattern.permute.xlu0 0
    %377 = vperm.xlu0 %376, %v307
    %v378 = vpop.permute.xlu0 %377
    %381 = vset.pattern.permute.xlu0 0
    %382 = vperm.xlu0 %381, %v308
    %v383 = vpop.permute.xlu0 %382
    %386 = vset.pattern.permute.xlu0 0
    %387 = vperm.xlu0 %386, %v309
    %v388 = vpop.permute.xlu0 %387
    %v390 = vpack.c.bf16 %v263, %v262
    %v391 = vpack.c.bf16 %v265, %v264
    %v392 = vpack.c.bf16 %v267, %v266
    %v393 = vpack.c.bf16 %v269, %v268
    %v394 = vpack.c.bf16 %v271, %v270
    %v395 = vpack.c.bf16 %v273, %v272
    %v396 = vpack.c.bf16 %v275, %v274
    %v397 = vpack.c.bf16 %v277, %v276
    %v414 = vunpack.c.l.b16 %v278
    %v415 = vunpack.c.l.b16 %v279
    %v416 = vunpack.c.l.b16 %v280
    %v417 = vunpack.c.l.b16 %v281
    %v418 = vunpack.c.l.b16 %v282
    %v419 = vunpack.c.l.b16 %v283
    %v420 = vunpack.c.l.b16 %v284
    %v421 = vunpack.c.l.b16 %v285
    %v422 = vunpack.c.l.b16 %v286
    %v423 = vunpack.c.l.b16 %v287
    %v424 = vunpack.c.l.b16 %v288
    %v425 = vunpack.c.l.b16 %v289
    %v426 = vunpack.c.l.b16 %v290
    %v427 = vunpack.c.l.b16 %v291
    %v428 = vunpack.c.l.b16 %v292
    %v429 = vunpack.c.l.b16 %v293
    %v430 = vpack.c.b16 %v415, %v414
    %v431 = vpack.c.b16 %v417, %v416
    %v432 = vpack.c.b16 %v419, %v418
    %v433 = vpack.c.b16 %v421, %v420
    %v434 = vpack.c.b16 %v423, %v422
    %v435 = vpack.c.b16 %v425, %v424
    %v436 = vpack.c.b16 %v427, %v426
    %v437 = vpack.c.b16 %v429, %v428
    %446 = vmatpush.bf16.msra.mxu0 %v397
    %447 = vmatpush.bf16.msra.mxu0 %v396
    %448 = vmatpush.bf16.msra.mxu0 %v395
    %449 = vmatpush.bf16.msra.mxu0 %v394
    %450 = vmatpush.bf16.msra.mxu0 %v393
    %451 = vmatpush.bf16.msra.mxu0 %v392
    %452 = vmatpush.bf16.msra.mxu0 %v391
    %453 = vmatpush.bf16.msra.mxu0 %v390
    %454 = vmatmul.bf16.gmra.mxu0 %v430
    %v455 = vpop.f32.mrf.mxu0
    %v456 = vadd.f32 %v313, %v455
    %v457 = vpop.f32.mrf.mxu0
    %v458 = vadd.f32 %v318, %v457
    %459 = vmatmul.bf16.gmra.mxu0 %v431
    %v460 = vpop.f32.mrf.mxu0
    %v461 = vadd.f32 %v323, %v460
    %v462 = vpop.f32.mrf.mxu0
    %v463 = vadd.f32 %v328, %v462
    %464 = vmatmul.bf16.gmra.mxu0 %v432
    %v465 = vpop.f32.mrf.mxu0
    %v466 = vadd.f32 %v333, %v465
    %v467 = vpop.f32.mrf.mxu0
    %v468 = vadd.f32 %v338, %v467
    %469 = vmatmul.bf16.gmra.mxu0 %v433
    %v470 = vpop.f32.mrf.mxu0
    %v471 = vadd.f32 %v343, %v470
    %v472 = vpop.f32.mrf.mxu0
    %v473 = vadd.f32 %v348, %v472
    %474 = vmatmul.bf16.gmra.mxu0 %v434
    %v475 = vpop.f32.mrf.mxu0
    %v476 = vadd.f32 %v353, %v475
    %v477 = vpop.f32.mrf.mxu0
    %v478 = vadd.f32 %v358, %v477
    %479 = vmatmul.bf16.gmra.mxu0 %v435
    %v480 = vpop.f32.mrf.mxu0
    %v481 = vadd.f32 %v363, %v480
    %v482 = vpop.f32.mrf.mxu0
    %v483 = vadd.f32 %v368, %v482
    %484 = vmatmul.bf16.gmra.mxu0 %v436
    %v485 = vpop.f32.mrf.mxu0
    %v486 = vadd.f32 %v373, %v485
    %v487 = vpop.f32.mrf.mxu0
    %v488 = vadd.f32 %v378, %v487
    %489 = vmatmul.bf16.gmra.mxu0 %v437
    %v490 = vpop.f32.mrf.mxu0
    %v491 = vadd.f32 %v383, %v490
    %v492 = vpop.f32.mrf.mxu0
    %v493 = vadd.f32 %v388, %v492
    %494 = vdwg.mxu0
    %v495 = vmax.f32 %v456, 0.0
    %v496 = vmax.f32 %v458, 0.0
    %v497 = vmax.f32 %v461, 0.0
    %v498 = vmax.f32 %v463, 0.0
    %v499 = vmax.f32 %v466, 0.0
    %v500 = vmax.f32 %v468, 0.0
    %v501 = vmax.f32 %v471, 0.0
    %v502 = vmax.f32 %v473, 0.0
    %v503 = vmax.f32 %v476, 0.0
    %v504 = vmax.f32 %v478, 0.0
    %v505 = vmax.f32 %v481, 0.0
    %v506 = vmax.f32 %v483, 0.0
    %v507 = vmax.f32 %v486, 0.0
    %v508 = vmax.f32 %v488, 0.0
    %v509 = vmax.f32 %v491, 0.0
    %v510 = vmax.f32 %v493, 0.0
    %v511 = vpack.c.bf16 %v496, %v495
    %v512 = vpack.c.bf16 %v498, %v497
    %v513 = vpack.c.bf16 %v500, %v499
    %v514 = vpack.c.bf16 %v502, %v501
    %v515 = vpack.c.bf16 %v504, %v503
    %v516 = vpack.c.bf16 %v506, %v505
    %v517 = vpack.c.bf16 %v508, %v507
    %v518 = vpack.c.bf16 %v510, %v509
    %519 = vmatpush.bf16.msra.mxu0 %v518
    %520 = vmatpush.bf16.msra.mxu0 %v517
    %521 = vmatpush.bf16.msra.mxu0 %v516
    %522 = vmatpush.bf16.msra.mxu0 %v515
    %523 = vmatpush.bf16.msra.mxu0 %v514
    %524 = vmatpush.bf16.msra.mxu0 %v513
    %525 = vmatpush.bf16.msra.mxu0 %v512
    %526 = vmatpush.bf16.msra.mxu0 %v511
    %527 = vmatmul.bf16.gmra.mxu0 %v430
    %v528 = vpop.f32.mrf.mxu0
    %v529 = vadd.f32 %v313, %v528
    %v530 = vpop.f32.mrf.mxu0
    %v531 = vadd.f32 %v318, %v530
    %532 = vmatmul.bf16.gmra.mxu0 %v431
    %v533 = vpop.f32.mrf.mxu0
    %v534 = vadd.f32 %v323, %v533
    %v535 = vpop.f32.mrf.mxu0
    %v536 = vadd.f32 %v328, %v535
    %537 = vmatmul.bf16.gmra.mxu0 %v432
    %v538 = vpop.f32.mrf.mxu0
    %v539 = vadd.f32 %v333, %v538
    %v540 = vpop.f32.mrf.mxu0
    %v541 = vadd.f32 %v338, %v540
    %542 = vmatmul.bf16.gmra.mxu0 %v433
    %v543 = vpop.f32.mrf.mxu0
    %v544 = vadd.f32 %v343, %v543
    %v545 = vpop.f32.mrf.mxu0
    %v546 = vadd.f32 %v348, %v545
    %547 = vmatmul.bf16.gmra.mxu0 %v434
    %v548 = vpop.f32.mrf.mxu0
    %v549 = vadd.f32 %v353, %v548
    %v550 = vpop.f32.mrf.mxu0
    %v551 = vadd.f32 %v358, %v550
    %552 = vmatmul.bf16.gmra.mxu0 %v435
    %v553 = vpop.f32.mrf.mxu0
    %v554 = vadd.f32 %v363, %v553
    %v555 = vpop.f32.mrf.mxu0
    %v556 = vadd.f32 %v368, %v555
    %557 = vmatmul.bf16.gmra.mxu0 %v436
    %v558 = vpop.f32.mrf.mxu0
    %v559 = vadd.f32 %v373, %v558
    %v560 = vpop.f32.mrf.mxu0
    %v561 = vadd.f32 %v378, %v560
    %562 = vmatmul.bf16.gmra.mxu0 %v437
    %v563 = vpop.f32.mrf.mxu0
    %v564 = vadd.f32 %v383, %v563
    %v565 = vpop.f32.mrf.mxu0
    %v566 = vadd.f32 %v388, %v565
    %567 = vdwg.mxu0
    %v568 = vmax.f32 %v529, 0.0
    %v569 = vmax.f32 %v531, 0.0
    %v570 = vmax.f32 %v534, 0.0
    %v571 = vmax.f32 %v536, 0.0
    %v572 = vmax.f32 %v539, 0.0
    %v573 = vmax.f32 %v541, 0.0
    %v574 = vmax.f32 %v544, 0.0
    %v575 = vmax.f32 %v546, 0.0
    %v576 = vmax.f32 %v549, 0.0
    %v577 = vmax.f32 %v551, 0.0
    %v578 = vmax.f32 %v554, 0.0
    %v579 = vmax.f32 %v556, 0.0
    %v580 = vmax.f32 %v559, 0.0
    %v581 = vmax.f32 %v561, 0.0
    %v582 = vmax.f32 %v564, 0.0
    %v583 = vmax.f32 %v566, 0.0
    %v584 = vpack.c.bf16 %v569, %v568
    %v585 = vpack.c.bf16 %v571, %v570
    %v586 = vpack.c.bf16 %v573, %v572
    %v587 = vpack.c.bf16 %v575, %v574
    %v588 = vpack.c.bf16 %v577, %v576
    %v589 = vpack.c.bf16 %v579, %v578
    %v590 = vpack.c.bf16 %v581, %v580
    %v591 = vpack.c.bf16 %v583, %v582
    %592 = vmatpush.bf16.msra.mxu0 %v591
    %593 = vmatpush.bf16.msra.mxu0 %v590
    %594 = vmatpush.bf16.msra.mxu0 %v589
    %595 = vmatpush.bf16.msra.mxu0 %v588
    %596 = vmatpush.bf16.msra.mxu0 %v587
    %597 = vmatpush.bf16.msra.mxu0 %v586
    %598 = vmatpush.bf16.msra.mxu0 %v585
    %599 = vmatpush.bf16.msra.mxu0 %v584
    %600 = vmatmul.bf16.gmra.mxu0 %v430
    %v601 = vpop.f32.mrf.mxu0
    %v602 = vadd.f32 %v313, %v601
    %v603 = vpop.f32.mrf.mxu0
    %v604 = vadd.f32 %v318, %v603
    %605 = vmatmul.bf16.gmra.mxu0 %v431
    %v606 = vpop.f32.mrf.mxu0
    %v607 = vadd.f32 %v323, %v606
    %v608 = vpop.f32.mrf.mxu0
    %v609 = vadd.f32 %v328, %v608
    %610 = vmatmul.bf16.gmra.mxu0 %v432
    %v611 = vpop.f32.mrf.mxu0
    %v612 = vadd.f32 %v333, %v611
    %v613 = vpop.f32.mrf.mxu0
    %v614 = vadd.f32 %v338, %v613
    %615 = vmatmul.bf16.gmra.mxu0 %v433
    %v616 = vpop.f32.mrf.mxu0
    %v617 = vadd.f32 %v343, %v616
    %v618 = vpop.f32.mrf.mxu0
    %v619 = vadd.f32 %v348, %v618
    %620 = vmatmul.bf16.gmra.mxu0 %v434
    %v621 = vpop.f32.mrf.mxu0
    %v622 = vadd.f32 %v353, %v621
    %v623 = vpop.f32.mrf.mxu0
    %v624 = vadd.f32 %v358, %v623
    %625 = vmatmul.bf16.gmra.mxu0 %v435
    %v626 = vpop.f32.mrf.mxu0
    %v627 = vadd.f32 %v363, %v626
    %v628 = vpop.f32.mrf.mxu0
    %v629 = vadd.f32 %v368, %v628
    %630 = vmatmul.bf16.gmra.mxu0 %v436
    %v631 = vpop.f32.mrf.mxu0
    %v632 = vadd.f32 %v373, %v631
    %v633 = vpop.f32.mrf.mxu0
    %v634 = vadd.f32 %v378, %v633
    %635 = vmatmul.bf16.gmra.mxu0 %v437
    %v636 = vpop.f32.mrf.mxu0
    %v637 = vadd.f32 %v383, %v636
    %v638 = vpop.f32.mrf.mxu0
    %v639 = vadd.f32 %v388, %v638
    %640 = vdwg.mxu0
    %v641 = vmax.f32 %v602, 0.0
    %v642 = vmax.f32 %v604, 0.0
    %v643 = vmax.f32 %v607, 0.0
    %v644 = vmax.f32 %v609, 0.0
    %v645 = vmax.f32 %v612, 0.0
    %v646 = vmax.f32 %v614, 0.0
    %v647 = vmax.f32 %v617, 0.0
    %v648 = vmax.f32 %v619, 0.0
    %v649 = vmax.f32 %v622, 0.0
    %v650 = vmax.f32 %v624, 0.0
    %v651 = vmax.f32 %v627, 0.0
    %v652 = vmax.f32 %v629, 0.0
    %v653 = vmax.f32 %v632, 0.0
    %v654 = vmax.f32 %v634, 0.0
    %v655 = vmax.f32 %v637, 0.0
    %v656 = vmax.f32 %v639, 0.0
    %v657 = vpack.c.bf16 %v642, %v641
    %v658 = vpack.c.bf16 %v644, %v643
    %v659 = vpack.c.bf16 %v646, %v645
    %v660 = vpack.c.bf16 %v648, %v647
    %v661 = vpack.c.bf16 %v650, %v649
    %v662 = vpack.c.bf16 %v652, %v651
    %v663 = vpack.c.bf16 %v654, %v653
    %v664 = vpack.c.bf16 %v656, %v655
    %665 = vmatpush.bf16.msra.mxu0 %v664
    %666 = vmatpush.bf16.msra.mxu0 %v663
    %667 = vmatpush.bf16.msra.mxu0 %v662
    %668 = vmatpush.bf16.msra.mxu0 %v661
    %669 = vmatpush.bf16.msra.mxu0 %v660
    %670 = vmatpush.bf16.msra.mxu0 %v659
    %671 = vmatpush.bf16.msra.mxu0 %v658
    %672 = vmatpush.bf16.msra.mxu0 %v657
    %673 = vmatmul.bf16.gmra.mxu0 %v430
    %v674 = vpop.f32.mrf.mxu0
    %v675 = vadd.f32 %v313, %v674
    %v676 = vpop.f32.mrf.mxu0
    %v677 = vadd.f32 %v318, %v676
    %678 = vmatmul.bf16.gmra.mxu0 %v431
    %v679 = vpop.f32.mrf.mxu0
    %v680 = vadd.f32 %v323, %v679
    %v681 = vpop.f32.mrf.mxu0
    %v682 = vadd.f32 %v328, %v681
    %683 = vmatmul.bf16.gmra.mxu0 %v432
    %v684 = vpop.f32.mrf.mxu0
    %v685 = vadd.f32 %v333, %v684
    %v686 = vpop.f32.mrf.mxu0
    %v687 = vadd.f32 %v338, %v686
    %688 = vmatmul.bf16.gmra.mxu0 %v433
    %v689 = vpop.f32.mrf.mxu0
    %v690 = vadd.f32 %v343, %v689
    %v691 = vpop.f32.mrf.mxu0
    %v692 = vadd.f32 %v348, %v691
    %693 = vmatmul.bf16.gmra.mxu0 %v434
    %v694 = vpop.f32.mrf.mxu0
    %v695 = vadd.f32 %v353, %v694
    %v696 = vpop.f32.mrf.mxu0
    %v697 = vadd.f32 %v358, %v696
    %698 = vmatmul.bf16.gmra.mxu0 %v435
    %v699 = vpop.f32.mrf.mxu0
    %v700 = vadd.f32 %v363, %v699
    %v701 = vpop.f32.mrf.mxu0
    %v702 = vadd.f32 %v368, %v701
    %703 = vmatmul.bf16.gmra.mxu0 %v436
    %v704 = vpop.f32.mrf.mxu0
    %v705 = vadd.f32 %v373, %v704
    %v706 = vpop.f32.mrf.mxu0
    %v707 = vadd.f32 %v378, %v706
    %708 = vmatmul.bf16.gmra.mxu0 %v437
    %v709 = vpop.f32.mrf.mxu0
    %v710 = vadd.f32 %v383, %v709
    %v711 = vpop.f32.mrf.mxu0
    %v712 = vadd.f32 %v388, %v711
    %713 = vdwg.mxu0
    %v714 = vmax.f32 %v675, 0.0
    %v715 = vmax.f32 %v677, 0.0
    %v716 = vmax.f32 %v680, 0.0
    %v717 = vmax.f32 %v682, 0.0
    %v718 = vmax.f32 %v685, 0.0
    %v719 = vmax.f32 %v687, 0.0
    %v720 = vmax.f32 %v690, 0.0
    %v721 = vmax.f32 %v692, 0.0
    %v722 = vmax.f32 %v695, 0.0
    %v723 = vmax.f32 %v697, 0.0
    %v724 = vmax.f32 %v700, 0.0
    %v725 = vmax.f32 %v702, 0.0
    %v726 = vmax.f32 %v705, 0.0
    %v727 = vmax.f32 %v707, 0.0
    %v728 = vmax.f32 %v710, 0.0
    %v729 = vmax.f32 %v712, 0.0
    %v730 = vpack.c.bf16 %v715, %v714
    %v731 = vpack.c.bf16 %v717, %v716
    %v732 = vpack.c.bf16 %v719, %v718
    %v733 = vpack.c.bf16 %v721, %v720
    %v734 = vpack.c.bf16 %v723, %v722
    %v735 = vpack.c.bf16 %v725, %v724
    %v736 = vpack.c.bf16 %v727, %v726
    %v737 = vpack.c.bf16 %v729, %v728
    %738 = vmatpush.bf16.msra.mxu0 %v737
    %739 = vmatpush.bf16.msra.mxu0 %v736
    %740 = vmatpush.bf16.msra.mxu0 %v735
    %741 = vmatpush.bf16.msra.mxu0 %v734
    %742 = vmatpush.bf16.msra.mxu0 %v733
    %743 = vmatpush.bf16.msra.mxu0 %v732
    %744 = vmatpush.bf16.msra.mxu0 %v731
    %745 = vmatpush.bf16.msra.mxu0 %v730
    %746 = vmatmul.bf16.gmra.mxu0 %v430
    %v747 = vpop.f32.mrf.mxu0
    %v748 = vadd.f32 %v313, %v747
    %v749 = vpop.f32.mrf.mxu0
    %v750 = vadd.f32 %v318, %v749
    %751 = vmatmul.bf16.gmra.mxu0 %v431
    %v752 = vpop.f32.mrf.mxu0
    %v753 = vadd.f32 %v323, %v752
    %v754 = vpop.f32.mrf.mxu0
    %v755 = vadd.f32 %v328, %v754
    %756 = vmatmul.bf16.gmra.mxu0 %v432
    %v757 = vpop.f32.mrf.mxu0
    %v758 = vadd.f32 %v333, %v757
    %v759 = vpop.f32.mrf.mxu0
    %v760 = vadd.f32 %v338, %v759
    %761 = vmatmul.bf16.gmra.mxu0 %v433
    %v762 = vpop.f32.mrf.mxu0
    %v763 = vadd.f32 %v343, %v762
    %v764 = vpop.f32.mrf.mxu0
    %v765 = vadd.f32 %v348, %v764
    %766 = vmatmul.bf16.gmra.mxu0 %v434
    %v767 = vpop.f32.mrf.mxu0
    %v768 = vadd.f32 %v353, %v767
    %v769 = vpop.f32.mrf.mxu0
    %v770 = vadd.f32 %v358, %v769
    %771 = vmatmul.bf16.gmra.mxu0 %v435
    %v772 = vpop.f32.mrf.mxu0
    %v773 = vadd.f32 %v363, %v772
    %v774 = vpop.f32.mrf.mxu0
    %v775 = vadd.f32 %v368, %v774
    %776 = vmatmul.bf16.gmra.mxu0 %v436
    %v777 = vpop.f32.mrf.mxu0
    %v778 = vadd.f32 %v373, %v777
    %v779 = vpop.f32.mrf.mxu0
    %v780 = vadd.f32 %v378, %v779
    %781 = vmatmul.bf16.gmra.mxu0 %v437
    %v782 = vpop.f32.mrf.mxu0
    %v783 = vadd.f32 %v383, %v782
    %v784 = vpop.f32.mrf.mxu0
    %v785 = vadd.f32 %v388, %v784
    %786 = vdwg.mxu0
    %v787 = vmax.f32 %v748, 0.0
    %v788 = vmax.f32 %v750, 0.0
    %v789 = vmax.f32 %v753, 0.0
    %v790 = vmax.f32 %v755, 0.0
    %v791 = vmax.f32 %v758, 0.0
    %v792 = vmax.f32 %v760, 0.0
    %v793 = vmax.f32 %v763, 0.0
    %v794 = vmax.f32 %v765, 0.0
    %v795 = vmax.f32 %v768, 0.0
    %v796 = vmax.f32 %v770, 0.0
    %v797 = vmax.f32 %v773, 0.0
    %v798 = vmax.f32 %v775, 0.0
    %v799 = vmax.f32 %v778, 0.0
    %v800 = vmax.f32 %v780, 0.0
    %v801 = vmax.f32 %v783, 0.0
    %v802 = vmax.f32 %v785, 0.0
    %v803 = vld [vmem:[%s5] sm:$0xf]
    %v804 = vpack.c.bf16 %v788, %v787
    %v805 = vpack.c.bf16 %v790, %v789
    %v806 = vpack.c.bf16 %v792, %v791
    %v807 = vpack.c.bf16 %v794, %v793
    %v808 = vpack.c.bf16 %v796, %v795
    %v809 = vpack.c.bf16 %v798, %v797
    %v810 = vpack.c.bf16 %v800, %v799
    %v811 = vpack.c.bf16 %v802, %v801
    %v812 = vld [vmem:[%s6] sm:$0xff]
    %814 = vset.pattern.permute.xlu0 0
    %815 = vperm.xlu0 %814, %v812
    %v816 = vpop.permute.xlu0 %815
    %818 = vmatpush.bf16.msra.mxu0 %v811
    %819 = vmatpush.bf16.msra.mxu0 %v810
    %820 = vmatpush.bf16.msra.mxu0 %v809
    %821 = vmatpush.bf16.msra.mxu0 %v808
    %822 = vmatpush.bf16.msra.mxu0 %v807
    %823 = vmatpush.bf16.msra.mxu0 %v806
    %824 = vmatpush.bf16.msra.mxu0 %v805
    %825 = vmatpush.bf16.msra.mxu0 %v804
    %826 = vmatmul.bf16.gmra.mxu0 %v803
    %v827 = vpop.f32.mrf.mxu0
    %v828 = vadd.f32 %v816, %v827
    %v829 = vpop.f32.mrf.mxu0
    %830 = vdwg.mxu0
    %v831 = vsub.f32 0.0, %v828
    %v832 = vmul.f32 %v831, 1.442695
    %v833 = vpow.pop %v832
    %v834 = vadd.f32 %v833, 1.0
    %v835 = vrcp.pop %v834
    %836 = vst [vmem:[#allocation2] sm:$0x1] %v835
    // Predicated region
    $region30: #{tpu_custom_call.1} parent=1 // pred_check
      _
    $region31: #{tpu_custom_call.1} parent=1 // pred_check_branch
      %838 = sbr.rel (0) target = $region33
    $region32: #{tpu_custom_call.1} parent=1 // pred_region
      %840 = vsyncadd [#allocation3], 0
      %s842 = sshll.u32 [#allocation2], 4
      %s843 = int_to_ptr.vmem [resolvable:$true] %s842
      %s844 = sshll.u32 %s7, 4
      %s845 = int_to_ptr.hbm [resolvable:$true] %s844
      %847 = dma.vmem_to_hbm [thread:$0]  %s843, 16, %s845, [#allocation3]
    $region33: #{tpu_custom_call.1} parent=1 // pred_fallthru
      _
    // Predicated region
    $region34: #{tpu_custom_call.1} parent=1 // pred_check
      _
    $region35: #{tpu_custom_call.1} parent=1 // pred_check_branch
      %849 = sbr.rel (0) target = $region37
    $region36: #{tpu_custom_call.1} parent=1 // pred_region
      %851 = dma.done [#allocation3], 16
    $region37: #{tpu_custom_call.1} parent=1 // pred_fallthru
      _
    %852 = vsyncpa [#allocation3], 1

</llo_original>
